<compile_context>
chip_gen: v7x
topology: tpu7x:2x2x1
jax: 0.10.0
libtpu: 0.0.40
codegen_flags: <defaults>
</compile_context>

<pallas_src>
import math
from functools import partial

import jax
import jax.numpy as jnp
from jax.experimental import pallas as pl
from jax.experimental.pallas import tpu as pltpu

LN_EPS = 1e-5  # nn.LayerNorm default


def _patch_merging_kernel(x_ref, ln_ref, w_ref, o_ref, *, mxu_dtype=None):
    # x_ref : (TR, 2, W2, 2C)  row-pair tiles of the (B*H/2, 2, W/2, 2C) view
    # ln_ref: (4, 2C)          rows: gamma_even, gamma_odd, beta_even, beta_odd
    # w_ref : (2, 2C, 2Co)     w[0] = W^T rows for [x0|x2], w[1] for [x1|x3]
    # o_ref : (TR*W2, 2Co)
    tr, _, w2, c2 = x_ref.shape
    tm = tr * w2  # merged tokens in this tile

    xb = x_ref[...]
    # even-row half carries channels [x0 | x2]; odd-row half carries [x1 | x3].
    # ([:, k] selects whole (W2, 2C) tiles; the reshape only regroups leading
    # dims, so neither op is a lane relayout when W2 % 8 == 0.)
    a = xb[:, 0].reshape(tm, c2).astype(jnp.float32)
    b = xb[:, 1].reshape(tm, c2).astype(jnp.float32)

    ln = ln_ref[...].astype(jnp.float32)
    g_a, g_b, b_a, b_b = ln[0:1], ln[1:2], ln[2:3], ln[3:4]

    # One-pass LayerNorm statistics over the full 4C channels (f32), clamped.
    inv_4c = 1.0 / (2.0 * c2)
    mean = (jnp.sum(a, axis=-1, keepdims=True)
            + jnp.sum(b, axis=-1, keepdims=True)) * inv_4c
    mean_sq = (jnp.sum(a * a, axis=-1, keepdims=True)
               + jnp.sum(b * b, axis=-1, keepdims=True)) * inv_4c
    var = jnp.maximum(mean_sq - mean * mean, 0.0)
    inv = jax.lax.rsqrt(var + LN_EPS)

    y_a = ((a - mean) * inv) * g_a + b_a
    y_b = ((b - mean) * inv) * g_b + b_b

    # 4C-K matmul as two 2C-K dots (proven lowering), accumulated in f32.
    w_a, w_b = w_ref[0], w_ref[1]
    md = w_a.dtype if mxu_dtype is None else mxu_dtype
    acc = jnp.dot(y_a.astype(md), w_a.astype(md),
                  preferred_element_type=jnp.float32)
    acc = acc + jnp.dot(y_b.astype(md), w_b.astype(md),
                        preferred_element_type=jnp.float32)

    # Store the accumulator directly; lane-dense whenever 2*dim % 128 == 0.
    # TODO(synk): for 2C < 128 a lane-merging reshape to (TR, W2*2Co) would make
    # this store lane-dense too, but that reshape needs a sublane->lane relayout
    # Mosaic is not guaranteed to lower; left as masked stores.
    o_ref[...] = acc.astype(o_ref.dtype)


def _round_up(v, m):
    return ((v + m - 1) // m) * m


def _vmem_capacity_bytes(default=64 << 20):
    """Physical VMEM per TensorCore; conservative default if the query fails."""
    try:
        info = pltpu.get_tpu_info()
    except Exception:
        return default
    for name in ("vmem_capacity_bytes", "vmem_bytes", "vmem_size_bytes"):
        v = getattr(info, name, None)
        if v:
            return int(v)
    return default


def _pick_row_tile(n_rows, cap_rows, tokens_per_row, *,
                   target_steps=8, min_tokens_per_tile=512):
    """Row-pairs per grid step.

    Aims for ~target_steps grid steps (>= 3-4 per v7x TensorCore) while keeping
    >= min_tokens_per_tile merged tokens per tile and staying under the VMEM
    cap.  The out-block sublane count (tr * W2) stays a multiple of 8 unless a
    single full block is used, so the (8,128) block constraint always holds.
    """
    cap = max(1, min(n_rows, cap_rows))
    want = max(pl.cdiv(n_rows, target_steps),
               pl.cdiv(min_tokens_per_tile, tokens_per_row), 1)
    tr = min(cap, want)
    if tr >= n_rows:
        return n_rows
    step = 8 // math.gcd(tokens_per_row, 8)   # keeps (tr * W2) % 8 == 0
    tr = max(step, (tr // step) * step)
    return n_rows if tr >= n_rows else tr


def patch_merging(x, gamma, beta, weight, input_resolution, *, mxu_dtype=None):
    """x: (B, L, C) with L == H*W.  Returns (B, L//4, 2*C).

    gamma, beta: (4*C,)  LayerNorm params.
    weight: (2*C, 4*C)   nn.Linear weight (PyTorch convention, y = x @ W.T).
    mxu_dtype:           optional dtype for the MXU operands (e.g. jnp.bfloat16
                         on v5e for f32 models); None keeps the weight dtype.
    """
    H, W = input_resolution
    B, L, C = x.shape
    assert L == H * W, "input feature has wrong size"
    assert H % 2 == 0 and W % 2 == 0, f"x size ({H}*{W}) are not even."

    W2 = W // 2
    n_rows = B * (H // 2)          # row-pairs
    n_tok = n_rows * W2            # merged tokens
    c2 = 2 * C
    c2out = 2 * C                  # Linear(4C -> 2C)

    # --- fused 2x2 gather: pure metadata reshape of x, no HBM copy -------------
    xv = x.reshape(n_rows, 2, W2, c2)

    # Fold the fused-gather channel permutation into the params (trace-time).
    # Even-row half = [x0 | x2] (blocks 0, 2); odd-row half = [x1 | x3] (1, 3).
    g = gamma.reshape(4, C)
    bt = beta.reshape(4, C)
    ln_ab = jnp.stack([
        jnp.concatenate([g[0], g[2]]),
        jnp.concatenate([g[1], g[3]]),
        jnp.concatenate([bt[0], bt[2]]),
        jnp.concatenate([bt[1], bt[3]]),
    ])                                                  # (4, 2C)
    wt = weight.T.reshape(4, C, c2out)                  # rows of W^T by block
    w_ab = jnp.stack([
        jnp.concatenate([wt[0], wt[2]], axis=0),        # (2C, 2Co) even half
        jnp.concatenate([wt[1], wt[3]], axis=0),        # (2C, 2Co) odd half
    ])                                                  # (2, 2C, 2Co)

    # --- (8,128)-padding-aware VMEM accounting ---------------------------------
    in_b = int(x.dtype.itemsize)
    out_b = int(x.dtype.itemsize)
    ln_b = int(ln_ab.dtype.itemsize)
    wgt_b = int(w_ab.dtype.itemsize)

    c2_pad = _round_up(c2, 128)
    c2o_pad = _round_up(c2out, 128)
    w2_pad = _round_up(W2, 8)
    x_row = 2 * w2_pad * c2_pad * in_b          # x bytes per row-pair (padded)
    o_row = W2 * c2o_pad * out_b                # out bytes per row-pair (padded)
    per_row_db = 2 * (x_row + o_row)            # double-buffered

    ln_vmem = _round_up(4, 8) * c2_pad * ln_b
    w_vmem = 2 * _round_up(c2, 8) * c2o_pad * wgt_b
    param_vmem = 2 * (ln_vmem + w_vmem)         # params are double-buffered too

    # --- generation-aware VMEM budget & tile size -------------------------------
    vmem_cap = _vmem_capacity_bytes()                        # 128 MiB v5e/v6e, 64 MiB v7x
    vmem_target = min(int(0.75 * vmem_cap), 96 << 20)
    margin = 4 << 20                                         # Mosaic internal scratch etc.
    tile_budget = max(per_row_db, vmem_target - param_vmem - margin)
    cap_rows = max(1, tile_budget // per_row_db)

    tr = _pick_row_tile(n_rows, cap_rows, W2)
    grid = (pl.cdiv(n_rows, tr),)

    est_vmem = tr * per_row_db + param_vmem + margin
    vmem_limit = int(min(max(vmem_target, est_vmem), int(0.95 * vmem_cap)))

    cost = pl.CostEstimate(
        flops=2 * n_tok * (4 * C) * c2out,
        transcendentals=n_tok,
        bytes_accessed=(n_tok * 4 * C * in_b + n_tok * c2out * out_b
                        + int(ln_ab.size) * ln_b + int(w_ab.size) * wgt_b),
    )

    kernel = partial(_patch_merging_kernel, mxu_dtype=mxu_dtype)

    out = pl.pallas_call(
        kernel,
        out_shape=jax.ShapeDtypeStruct((n_tok, c2out), x.dtype),
        grid_spec=pltpu.PrefetchScalarGridSpec(
            num_scalar_prefetch=0,
            grid=grid,
            in_specs=[
                pl.BlockSpec((tr, 2, W2, c2), lambda i: (i, 0, 0, 0)),   # x row-pairs
                pl.BlockSpec((4, c2), lambda i: (0, 0)),                 # LN params
                pl.BlockSpec((2, c2, c2out), lambda i: (0, 0, 0)),       # weight halves
            ],
            out_specs=pl.BlockSpec((tr * W2, c2out), lambda i: (i, 0)),
        ),
        compiler_params=pltpu.CompilerParams(
            dimension_semantics=("parallel",),
            vmem_limit_bytes=vmem_limit,
        ),
        cost_estimate=cost,
    )(xv, ln_ab, w_ab)

    # Free metadata reshape back to the module's (B, L//4, 2C) layout.
    return out.reshape(B, (H // 2) * W2, c2out)


def patch_merging_ref(x, gamma, beta, weight, input_resolution):
    """Pure-JAX reference mirroring the PyTorch forward."""
    H, W = input_resolution
    B, L, C = x.shape
    xv = x.reshape(B, H, W, C)
    x0 = xv[:, 0::2, 0::2, :]
    x1 = xv[:, 1::2, 0::2, :]
    x2 = xv[:, 0::2, 1::2, :]
    x3 = xv[:, 1::2, 1::2, :]
    xm = jnp.concatenate([x0, x1, x2, x3], axis=-1).reshape(B, -1, 4 * C)
    mean = jnp.mean(xm, axis=-1, keepdims=True)
    var = jnp.mean((xm - mean) ** 2, axis=-1, keepdims=True)
    xn = (xm - mean) / jnp.sqrt(var + LN_EPS)
    y = xn * gamma + beta
    return y @ weight.T


if __name__ == "__main__":
    # Module config: dim = C = 32, input_resolution = (16, 16), batch = 2
    B, H, W, C = 2, 16, 16, 32
    key = jax.random.PRNGKey(0)
    kx, kg, kb, kw = jax.random.split(key, 4)

    x = jax.random.normal(kx, (B, H * W, C), dtype=jnp.float32)
    gamma = 1.0 + 0.02 * jax.random.normal(kg, (4 * C,), dtype=jnp.float32)
    beta = 0.02 * jax.random.normal(kb, (4 * C,), dtype=jnp.float32)
    weight = 0.05 * jax.random.normal(kw, (2 * C, 4 * C), dtype=jnp.float32)

    out = patch_merging(x, gamma, beta, weight, (H, W))
    out = jax.block_until_ready(out)

    ref = patch_merging_ref(x, gamma, beta, weight, (H, W))
    assert out.shape == (B, (H // 2) * (W // 2), 2 * C), out.shape
    assert jnp.allclose(out, ref, atol=1e-3, rtol=1e-3), float(
        jnp.max(jnp.abs(out - ref)))

    print("KERNEL_OK")
</pallas_src>

<mosaic_0001>
module attributes {stable_mosaic.version = 11 : i64} {
  func.func @_patch_merging_kernel(%arg0: i32, %arg1: memref<16x2x8x64xf32, #tpu.memory_space<vmem>>, %arg2: memref<4x64xf32, #tpu.memory_space<vmem>>, %arg3: memref<2x64x64xf32, #tpu.memory_space<vmem>>, %arg4: memref<128x64xf32, #tpu.memory_space<vmem>>) attributes {dimension_semantics = [#tpu.dimension_semantics<parallel>], iteration_bounds = array<i64: 1>, scalar_prefetch = 0 : i64, scratch_operands = 0 : i64, tpu.core_type = #tpu.core_type<tc>, window_params = [{transform_indices = @transform_0, window_bounds = array<i64: 16, 2, 8, 64>}, {pipeline_mode = #tpu.pipeline_mode<synchronous>, transform_indices = @transform_1, window_bounds = array<i64: 4, 64>}, {pipeline_mode = #tpu.pipeline_mode<synchronous>, transform_indices = @transform_2, window_bounds = array<i64: 2, 64, 64>}, {transform_indices = @transform_3, window_bounds = array<i64: 128, 64>}]} {
    %c0 = arith.constant 0 : index
    %c0_0 = arith.constant 0 : index
    %c0_1 = arith.constant 0 : index
    %c0_2 = arith.constant 0 : index
    %0 = vector.load %arg1[%c0, %c0_0, %c0_1, %c0_2] : memref<16x2x8x64xf32, #tpu.memory_space<vmem>>, vector<16x2x8x64xf32>
    %1 = vector.extract_strided_slice %0 {offsets = [0, 0, 0, 0], sizes = [16, 1, 8, 64], strides = [1, 1, 1, 1]} : vector<16x2x8x64xf32> to vector<16x1x8x64xf32>
    %2 = vector.shape_cast %1 : vector<16x1x8x64xf32> to vector<16x8x64xf32>
    %3 = vector.shape_cast %2 : vector<16x8x64xf32> to vector<128x64xf32>
    %4 = vector.extract_strided_slice %0 {offsets = [0, 1, 0, 0], sizes = [16, 1, 8, 64], strides = [1, 1, 1, 1]} : vector<16x2x8x64xf32> to vector<16x1x8x64xf32>
    %5 = vector.shape_cast %4 : vector<16x1x8x64xf32> to vector<16x8x64xf32>
    %6 = vector.shape_cast %5 : vector<16x8x64xf32> to vector<128x64xf32>
    %c0_3 = arith.constant 0 : index
    %c0_4 = arith.constant 0 : index
    %7 = vector.load %arg2[%c0_3, %c0_4] : memref<4x64xf32, #tpu.memory_space<vmem>>, vector<4x64xf32>
    %8 = vector.extract_strided_slice %7 {offsets = [0, 0], sizes = [1, 64], strides = [1, 1]} : vector<4x64xf32> to vector<1x64xf32>
    %9 = vector.extract_strided_slice %7 {offsets = [1, 0], sizes = [1, 64], strides = [1, 1]} : vector<4x64xf32> to vector<1x64xf32>
    %10 = vector.extract_strided_slice %7 {offsets = [2, 0], sizes = [1, 64], strides = [1, 1]} : vector<4x64xf32> to vector<1x64xf32>
    %11 = vector.extract_strided_slice %7 {offsets = [3, 0], sizes = [1, 64], strides = [1, 1]} : vector<4x64xf32> to vector<1x64xf32>
    %cst = arith.constant dense<0.000000e+00> : vector<128xf32>
    %12 = vector.multi_reduction <add>, %3, %cst [1] : vector<128x64xf32> to vector<128xf32>
    %13 = vector.shape_cast %12 : vector<128xf32> to vector<128x1xf32>
    %cst_5 = arith.constant dense<0.000000e+00> : vector<128xf32>
    %14 = vector.multi_reduction <add>, %6, %cst_5 [1] : vector<128x64xf32> to vector<128xf32>
    %15 = vector.shape_cast %14 : vector<128xf32> to vector<128x1xf32>
    %16 = arith.addf %13, %15 : vector<128x1xf32>
    %cst_6 = arith.constant 7.812500e-03 : f32
    %17 = vector.broadcast %cst_6 : f32 to vector<128x1xf32>
    %18 = arith.mulf %16, %17 : vector<128x1xf32>
    %19 = arith.mulf %3, %3 : vector<128x64xf32>
    %cst_7 = arith.constant dense<0.000000e+00> : vector<128xf32>
    %20 = vector.multi_reduction <add>, %19, %cst_7 [1] : vector<128x64xf32> to vector<128xf32>
    %21 = vector.shape_cast %20 : vector<128xf32> to vector<128x1xf32>
    %22 = arith.mulf %6, %6 : vector<128x64xf32>
    %cst_8 = arith.constant dense<0.000000e+00> : vector<128xf32>
    %23 = vector.multi_reduction <add>, %22, %cst_8 [1] : vector<128x64xf32> to vector<128xf32>
    %24 = vector.shape_cast %23 : vector<128xf32> to vector<128x1xf32>
    %25 = arith.addf %21, %24 : vector<128x1xf32>
    %cst_9 = arith.constant 7.812500e-03 : f32
    %26 = vector.broadcast %cst_9 : f32 to vector<128x1xf32>
    %27 = arith.mulf %25, %26 : vector<128x1xf32>
    %28 = arith.mulf %18, %18 : vector<128x1xf32>
    %29 = arith.subf %27, %28 : vector<128x1xf32>
    %cst_10 = arith.constant 0.000000e+00 : f32
    %30 = vector.broadcast %cst_10 : f32 to vector<128x1xf32>
    %31 = arith.maximumf %29, %30 : vector<128x1xf32>
    %cst_11 = arith.constant 9.99999974E-6 : f32
    %32 = vector.broadcast %cst_11 : f32 to vector<128x1xf32>
    %33 = arith.addf %31, %32 : vector<128x1xf32>
    %34 = math.rsqrt %33 : vector<128x1xf32>
    %35 = vector.broadcast %18 : vector<128x1xf32> to vector<128x64xf32>
    %36 = arith.subf %3, %35 : vector<128x64xf32>
    %37 = vector.broadcast %34 : vector<128x1xf32> to vector<128x64xf32>
    %38 = arith.mulf %36, %37 : vector<128x64xf32>
    %39 = vector.broadcast %8 : vector<1x64xf32> to vector<128x64xf32>
    %40 = arith.mulf %38, %39 : vector<128x64xf32>
    %41 = vector.broadcast %10 : vector<1x64xf32> to vector<128x64xf32>
    %42 = arith.addf %40, %41 : vector<128x64xf32>
    %43 = vector.broadcast %18 : vector<128x1xf32> to vector<128x64xf32>
    %44 = arith.subf %6, %43 : vector<128x64xf32>
    %45 = vector.broadcast %34 : vector<128x1xf32> to vector<128x64xf32>
    %46 = arith.mulf %44, %45 : vector<128x64xf32>
    %47 = vector.broadcast %9 : vector<1x64xf32> to vector<128x64xf32>
    %48 = arith.mulf %46, %47 : vector<128x64xf32>
    %49 = vector.broadcast %11 : vector<1x64xf32> to vector<128x64xf32>
    %50 = arith.addf %48, %49 : vector<128x64xf32>
    %c0_12 = arith.constant 0 : index
    %c0_13 = arith.constant 0 : index
    %c0_14 = arith.constant 0 : index
    %51 = vector.load %arg3[%c0_12, %c0_13, %c0_14] : memref<2x64x64xf32, #tpu.memory_space<vmem>>, vector<1x64x64xf32>
    %52 = vector.shape_cast %51 : vector<1x64x64xf32> to vector<64x64xf32>
    %c1 = arith.constant 1 : index
    %c0_15 = arith.constant 0 : index
    %c0_16 = arith.constant 0 : index
    %53 = vector.load %arg3[%c1, %c0_15, %c0_16] : memref<2x64x64xf32, #tpu.memory_space<vmem>>, vector<1x64x64xf32>
    %54 = vector.shape_cast %53 : vector<1x64x64xf32> to vector<64x64xf32>
    %cst_17 = arith.constant dense<0.000000e+00> : vector<128x64xf32>
    %55 = tpu.matmul %42, %52, %cst_17 {dimension_numbers = #tpu.dot_dimension_numbers<[1], [0], [0], [1], [0, 0, 1, 1], [], []>} : vector<128x64xf32>, vector<64x64xf32>, vector<128x64xf32> -> vector<128x64xf32>
    %cst_18 = arith.constant dense<0.000000e+00> : vector<128x64xf32>
    %56 = tpu.matmul %50, %54, %cst_18 {dimension_numbers = #tpu.dot_dimension_numbers<[1], [0], [0], [1], [0, 0, 1, 1], [], []>} : vector<128x64xf32>, vector<64x64xf32>, vector<128x64xf32> -> vector<128x64xf32>
    %57 = arith.addf %55, %56 : vector<128x64xf32>
    %c0_19 = arith.constant 0 : index
    %c0_20 = arith.constant 0 : index
    %58 = vector.load %arg4[%c0_19, %c0_20] : memref<128x64xf32, #tpu.memory_space<vmem>>, vector<128x64xf32>
    tpu.vector_store %arg4[%c0_19, %c0_20], %57 {strides = array<i32>} : memref<128x64xf32, #tpu.memory_space<vmem>>, vector<128x64xf32>,
    return
  }
  func.func @transform_0(%arg0: i32) -> (i32, i32, i32, i32) {
    %c0_i32 = arith.constant 0 : i32
    %c0_i32_0 = arith.constant 0 : i32
    %c0_i32_1 = arith.constant 0 : i32
    %c0_i32_2 = arith.constant 0 : i32
    return %arg0, %c0_i32, %c0_i32_0, %c0_i32_1 : i32, i32, i32, i32
  }
  func.func @transform_1(%arg0: i32) -> (i32, i32) {
    %c0_i32 = arith.constant 0 : i32
    %c0_i32_0 = arith.constant 0 : i32
    %c0_i32_1 = arith.constant 0 : i32
    return %c0_i32, %c0_i32_0 : i32, i32
  }
  func.func @transform_2(%arg0: i32) -> (i32, i32, i32) {
    %c0_i32 = arith.constant 0 : i32
    %c0_i32_0 = arith.constant 0 : i32
    %c0_i32_1 = arith.constant 0 : i32
    %c0_i32_2 = arith.constant 0 : i32
    return %c0_i32, %c0_i32_0, %c0_i32_1 : i32, i32, i32
  }
  func.func @transform_3(%arg0: i32) -> (i32, i32) {
    %c0_i32 = arith.constant 0 : i32
    %c0_i32_0 = arith.constant 0 : i32
    return %arg0, %c0_i32 : i32, i32
  }
}

</mosaic_0001>

<llo_original>
// kernel: tpu_custom_call.1
$region0: #{tpu_custom_call.1}
  #allocation0 [shape = 'u32[]', space=smem, size = 0x4, offset = 0x4, fixed_abs, tag = 'smem constant byte address 0x4 - core index']
  #allocation1 [shape = 'u32[144,128]{1,0:T(1,128)}', space=vmem, size = 0x12000, scoped, tag = 'internal scratch']
  %s0 = inlined_call_operand.hbm [shape: f32[16,2,8,64], index: 0, kind: input, shape index: {}]
  %s1 = inlined_call_operand.hbm [shape: f32[4,64], index: 1, kind: input, shape index: {}]
  %s2 = inlined_call_operand.hbm [shape: f32[2,64,64], index: 2, kind: input, shape index: {}]
  %s3 = inlined_call_operand.vmem [shape: f32[128,64], index: 3, kind: output, shape index: {}]
  %s4 = sld [smem:[#allocation0]]
  $region34: #{tpu_custom_call.1} parent=0
    _
  %s6 = ssub.s32 1, %s4
  %s7 = scalar_select 0, %s6, %s4
  $region1: #{tpu_custom_call.1} parent=0
    #allocation2 [shape = 'u8[131072]{0}', space=vmem, size = 0x20000, scoped, tag = 'input window, operand 0, single buffered']
    #allocation3 [shape = 's32[1]{0}', space=sflag, size = 0x4, scoped, tag = 'scoped memory for tpu_custom_call.1']
    #allocation4 [shape = 'u8[2048]{0}', space=vmem, size = 0x800, scoped, tag = 'input window, operand 1, single buffered']
    #allocation5 [shape = 's32[1]{0}', space=sflag, size = 0x4, scoped, tag = 'scoped memory for tpu_custom_call.1']
    #allocation6 [shape = 'u8[65536]{0}', space=vmem, size = 0x10000, scoped, tag = 'input window, operand 2, single buffered']
    %8 = vsyncpa [#allocation3], 0
    %9 = vsyncpa [#allocation5], 0
    // Predicated region
    $region2: #{tpu_custom_call.1} parent=1 // pred_check
      _
    $region3: #{tpu_custom_call.1} parent=1 // pred_check_branch
      %11 = sbr.rel (0) target = $region5
    $region4: #{tpu_custom_call.1} parent=1 // pred_region
      %s13 = ssub.s32 4096, 4096
      %14 = vsyncadd [#allocation3], %s13
      %s15 = sshll.u32 [#allocation2], 4
      %s16 = int_to_ptr.vmem [resolvable:$true] %s15
      %21 = dma.hbm_to_vmem [thread:$0]  %s0, 4096, %s16, [#allocation3], 128, 128, 8
    $region5: #{tpu_custom_call.1} parent=1 // pred_fallthru
      _
    // Predicated region
    $region6: #{tpu_custom_call.1} parent=1 // pred_check
      _
    $region7: #{tpu_custom_call.1} parent=1 // pred_check_branch
      %23 = sbr.rel (0) target = $region9
    $region8: #{tpu_custom_call.1} parent=1 // pred_region
      %s25 = ssub.s32 64, 64
      %26 = vsyncadd [#allocation5], %s25
      %s28 = sshll.u32 [#allocation4], 4
      %s29 = int_to_ptr.vmem [resolvable:$true] %s28
      %31 = dma.hbm_to_vmem [thread:$0]  %s1, 64, %s29, [#allocation5]
    $region9: #{tpu_custom_call.1} parent=1 // pred_fallthru
      _
    // Predicated region
    $region10: #{tpu_custom_call.1} parent=1 // pred_check
      _
    $region11: #{tpu_custom_call.1} parent=1 // pred_check_branch
      %33 = sbr.rel (0) target = $region13
    $region12: #{tpu_custom_call.1} parent=1 // pred_region
      %s35 = ssub.s32 2048, 2048
      %36 = vsyncadd [#allocation5], %s35
      %s37 = sshll.u32 [#allocation6], 4
      %s38 = int_to_ptr.vmem [resolvable:$true] %s37
      %43 = dma.hbm_to_vmem [thread:$0]  %s2, 2048, %s38, [#allocation5], 128, 128, 8
    $region13: #{tpu_custom_call.1} parent=1 // pred_fallthru
      _
    // Predicated region
    $region14: #{tpu_custom_call.1} parent=1 // pred_check
      _
    $region15: #{tpu_custom_call.1} parent=1 // pred_check_branch
      %45 = sbr.rel (0) target = $region17
    $region16: #{tpu_custom_call.1} parent=1 // pred_region
      %46 = dma.done [#allocation3], 4096
    $region17: #{tpu_custom_call.1} parent=1 // pred_fallthru
      _
    // Predicated region
    $region18: #{tpu_custom_call.1} parent=1 // pred_check
      _
    $region19: #{tpu_custom_call.1} parent=1 // pred_check_branch
      %48 = sbr.rel (0) target = $region21
    $region20: #{tpu_custom_call.1} parent=1 // pred_region
      %49 = dma.done [#allocation5], 64
    $region21: #{tpu_custom_call.1} parent=1 // pred_fallthru
      _
    // Predicated region
    $region22: #{tpu_custom_call.1} parent=1 // pred_check
      _
    $region23: #{tpu_custom_call.1} parent=1 // pred_check_branch
      %51 = sbr.rel (0) target = $region25
    $region24: #{tpu_custom_call.1} parent=1 // pred_region
      %52 = dma.done [#allocation5], 2048
    $region25: #{tpu_custom_call.1} parent=1 // pred_fallthru
      _
    %v53 = vld [vmem:[#allocation2] sm:$0xff]
    %v54 = vld [vmem:[#allocation2 + $0x8] sm:$0xff]
    %v55 = vld [vmem:[#allocation2 + $0x10] sm:$0xff]
    %v56 = vld [vmem:[#allocation2 + $0x18] sm:$0xff]
    %v57 = vld [vmem:[#allocation2 + $0x20] sm:$0xff]
    %v58 = vld [vmem:[#allocation2 + $0x28] sm:$0xff]
    %v59 = vld [vmem:[#allocation2 + $0x30] sm:$0xff]
    %v60 = vld [vmem:[#allocation2 + $0x38] sm:$0xff]
    %v61 = vld [vmem:[#allocation2 + $0x40] sm:$0xff]
    %v62 = vld [vmem:[#allocation2 + $0x48] sm:$0xff]
    %v63 = vld [vmem:[#allocation2 + $0x50] sm:$0xff]
    %v64 = vld [vmem:[#allocation2 + $0x58] sm:$0xff]
    %v65 = vld [vmem:[#allocation2 + $0x60] sm:$0xff]
    %v66 = vld [vmem:[#allocation2 + $0x68] sm:$0xff]
    %v67 = vld [vmem:[#allocation2 + $0x70] sm:$0xff]
    %v68 = vld [vmem:[#allocation2 + $0x78] sm:$0xff]
    %v69 = vld [vmem:[#allocation2 + $0x80] sm:$0xff]
    %v70 = vld [vmem:[#allocation2 + $0x88] sm:$0xff]
    %v71 = vld [vmem:[#allocation2 + $0x90] sm:$0xff]
    %v72 = vld [vmem:[#allocation2 + $0x98] sm:$0xff]
    %v73 = vld [vmem:[#allocation2 + $0xa0] sm:$0xff]
    %v74 = vld [vmem:[#allocation2 + $0xa8] sm:$0xff]
    %v75 = vld [vmem:[#allocation2 + $0xb0] sm:$0xff]
    %v76 = vld [vmem:[#allocation2 + $0xb8] sm:$0xff]
    %v77 = vld [vmem:[#allocation2 + $0xc0] sm:$0xff]
    %v78 = vld [vmem:[#allocation2 + $0xc8] sm:$0xff]
    %v79 = vld [vmem:[#allocation2 + $0xd0] sm:$0xff]
    %v80 = vld [vmem:[#allocation2 + $0xd8] sm:$0xff]
    %v81 = vld [vmem:[#allocation2 + $0xe0] sm:$0xff]
    %v82 = vld [vmem:[#allocation2 + $0xe8] sm:$0xff]
    %v83 = vld [vmem:[#allocation2 + $0xf0] sm:$0xff]
    %v84 = vld [vmem:[#allocation2 + $0xf8] sm:$0xff]
    %v85 = vld [vmem:[#allocation4] sm:$0xf]
    %vm86 = vcmask 523264
    %v87 = vsel %vm86, %v53, 0.0
    %88 = vadd.xlane.f32.xlu0 %v87
    %v89 = vpop.xlane.xlu0 %88
    %v90 = vsel %vm86, %v55, 0.0
    %91 = vadd.xlane.f32.xlu0 %v90
    %v92 = vpop.xlane.xlu0 %91
    %v93 = vsel %vm86, %v57, 0.0
    %94 = vadd.xlane.f32.xlu0 %v93
    %v95 = vpop.xlane.xlu0 %94
    %v96 = vsel %vm86, %v59, 0.0
    %97 = vadd.xlane.f32.xlu0 %v96
    %v98 = vpop.xlane.xlu0 %97
    %v99 = vsel %vm86, %v61, 0.0
    %100 = vadd.xlane.f32.xlu0 %v99
    %v101 = vpop.xlane.xlu0 %100
    %v102 = vsel %vm86, %v63, 0.0
    %103 = vadd.xlane.f32.xlu0 %v102
    %v104 = vpop.xlane.xlu0 %103
    %v105 = vsel %vm86, %v65, 0.0
    %106 = vadd.xlane.f32.xlu0 %v105
    %v107 = vpop.xlane.xlu0 %106
    %v108 = vsel %vm86, %v67, 0.0
    %109 = vadd.xlane.f32.xlu0 %v108
    %v110 = vpop.xlane.xlu0 %109
    %v111 = vsel %vm86, %v69, 0.0
    %112 = vadd.xlane.f32.xlu0 %v111
    %v113 = vpop.xlane.xlu0 %112
    %v114 = vsel %vm86, %v71, 0.0
    %115 = vadd.xlane.f32.xlu0 %v114
    %v116 = vpop.xlane.xlu0 %115
    %v117 = vsel %vm86, %v73, 0.0
    %118 = vadd.xlane.f32.xlu0 %v117
    %v119 = vpop.xlane.xlu0 %118
    %v120 = vsel %vm86, %v75, 0.0
    %121 = vadd.xlane.f32.xlu0 %v120
    %v122 = vpop.xlane.xlu0 %121
    %v123 = vsel %vm86, %v77, 0.0
    %124 = vadd.xlane.f32.xlu0 %v123
    %v125 = vpop.xlane.xlu0 %124
    %v126 = vsel %vm86, %v79, 0.0
    %127 = vadd.xlane.f32.xlu0 %v126
    %v128 = vpop.xlane.xlu0 %127
    %v129 = vsel %vm86, %v81, 0.0
    %130 = vadd.xlane.f32.xlu0 %v129
    %v131 = vpop.xlane.xlu0 %130
    %v132 = vsel %vm86, %v83, 0.0
    %133 = vadd.xlane.f32.xlu0 %v132
    %v134 = vpop.xlane.xlu0 %133
    %v135 = vsel %vm86, %v54, 0.0
    %136 = vadd.xlane.f32.xlu0 %v135
    %v137 = vpop.xlane.xlu0 %136
    %v138 = vsel %vm86, %v56, 0.0
    %139 = vadd.xlane.f32.xlu0 %v138
    %v140 = vpop.xlane.xlu0 %139
    %v141 = vsel %vm86, %v58, 0.0
    %142 = vadd.xlane.f32.xlu0 %v141
    %v143 = vpop.xlane.xlu0 %142
    %v144 = vsel %vm86, %v60, 0.0
    %145 = vadd.xlane.f32.xlu0 %v144
    %v146 = vpop.xlane.xlu0 %145
    %v147 = vsel %vm86, %v62, 0.0
    %148 = vadd.xlane.f32.xlu0 %v147
    %v149 = vpop.xlane.xlu0 %148
    %v150 = vsel %vm86, %v64, 0.0
    %151 = vadd.xlane.f32.xlu0 %v150
    %v152 = vpop.xlane.xlu0 %151
    %v153 = vsel %vm86, %v66, 0.0
    %154 = vadd.xlane.f32.xlu0 %v153
    %v155 = vpop.xlane.xlu0 %154
    %v156 = vsel %vm86, %v68, 0.0
    %157 = vadd.xlane.f32.xlu0 %v156
    %v158 = vpop.xlane.xlu0 %157
    %v159 = vsel %vm86, %v70, 0.0
    %160 = vadd.xlane.f32.xlu0 %v159
    %v161 = vpop.xlane.xlu0 %160
    %v162 = vsel %vm86, %v72, 0.0
    %163 = vadd.xlane.f32.xlu0 %v162
    %v164 = vpop.xlane.xlu0 %163
    %v165 = vsel %vm86, %v74, 0.0
    %166 = vadd.xlane.f32.xlu0 %v165
    %v167 = vpop.xlane.xlu0 %166
    %v168 = vsel %vm86, %v76, 0.0
    %169 = vadd.xlane.f32.xlu0 %v168
    %v170 = vpop.xlane.xlu0 %169
    %v171 = vsel %vm86, %v78, 0.0
    %172 = vadd.xlane.f32.xlu0 %v171
    %v173 = vpop.xlane.xlu0 %172
    %v174 = vsel %vm86, %v80, 0.0
    %175 = vadd.xlane.f32.xlu0 %v174
    %v176 = vpop.xlane.xlu0 %175
    %v177 = vsel %vm86, %v82, 0.0
    %178 = vadd.xlane.f32.xlu0 %v177
    %v179 = vpop.xlane.xlu0 %178
    %v180 = vsel %vm86, %v84, 0.0
    %181 = vadd.xlane.f32.xlu0 %v180
    %v182 = vpop.xlane.xlu0 %181
    %v183 = vadd.f32 %v89, %v137
    %v184 = vadd.f32 %v92, %v140
    %v185 = vadd.f32 %v95, %v143
    %v186 = vadd.f32 %v98, %v146
    %v187 = vadd.f32 %v101, %v149
    %v188 = vadd.f32 %v104, %v152
    %v189 = vadd.f32 %v107, %v155
    %v190 = vadd.f32 %v110, %v158
    %v191 = vadd.f32 %v113, %v161
    %v192 = vadd.f32 %v116, %v164
    %v193 = vadd.f32 %v119, %v167
    %v194 = vadd.f32 %v122, %v170
    %v195 = vadd.f32 %v125, %v173
    %v196 = vadd.f32 %v128, %v176
    %v197 = vadd.f32 %v131, %v179
    %v198 = vadd.f32 %v134, %v182
    %v199 = vmul.f32 %v183, 0.0078125
    %v200 = vmul.f32 %v184, 0.0078125
    %v201 = vmul.f32 %v185, 0.0078125
    %v202 = vmul.f32 %v186, 0.0078125
    %v203 = vmul.f32 %v187, 0.0078125
    %v204 = vmul.f32 %v188, 0.0078125
    %v205 = vmul.f32 %v189, 0.0078125
    %v206 = vmul.f32 %v190, 0.0078125
    %v207 = vmul.f32 %v191, 0.0078125
    %v208 = vmul.f32 %v192, 0.0078125
    %v209 = vmul.f32 %v193, 0.0078125
    %v210 = vmul.f32 %v194, 0.0078125
    %v211 = vmul.f32 %v195, 0.0078125
    %v212 = vmul.f32 %v196, 0.0078125
    %v213 = vmul.f32 %v197, 0.0078125
    %v214 = vmul.f32 %v198, 0.0078125
    %v215 = vmul.f32 %v53, %v53
    %v216 = vmul.f32 %v55, %v55
    %v217 = vmul.f32 %v57, %v57
    %v218 = vmul.f32 %v59, %v59
    %v219 = vmul.f32 %v61, %v61
    %v220 = vmul.f32 %v63, %v63
    %v221 = vmul.f32 %v65, %v65
    %v222 = vmul.f32 %v67, %v67
    %v223 = vmul.f32 %v69, %v69
    %v224 = vmul.f32 %v71, %v71
    %v225 = vmul.f32 %v73, %v73
    %v226 = vmul.f32 %v75, %v75
    %v227 = vmul.f32 %v77, %v77
    %v228 = vmul.f32 %v79, %v79
    %v229 = vmul.f32 %v81, %v81
    %v230 = vmul.f32 %v83, %v83
    %v231 = vsel %vm86, %v215, 0.0
    %232 = vadd.xlane.f32.xlu0 %v231
    %v233 = vpop.xlane.xlu0 %232
    %v234 = vsel %vm86, %v216, 0.0
    %235 = vadd.xlane.f32.xlu0 %v234
    %v236 = vpop.xlane.xlu0 %235
    %v237 = vsel %vm86, %v217, 0.0
    %238 = vadd.xlane.f32.xlu0 %v237
    %v239 = vpop.xlane.xlu0 %238
    %v240 = vsel %vm86, %v218, 0.0
    %241 = vadd.xlane.f32.xlu0 %v240
    %v242 = vpop.xlane.xlu0 %241
    %v243 = vsel %vm86, %v219, 0.0
    %244 = vadd.xlane.f32.xlu0 %v243
    %v245 = vpop.xlane.xlu0 %244
    %v246 = vsel %vm86, %v220, 0.0
    %247 = vadd.xlane.f32.xlu0 %v246
    %v248 = vpop.xlane.xlu0 %247
    %v249 = vsel %vm86, %v221, 0.0
    %250 = vadd.xlane.f32.xlu0 %v249
    %v251 = vpop.xlane.xlu0 %250
    %v252 = vsel %vm86, %v222, 0.0
    %253 = vadd.xlane.f32.xlu0 %v252
    %v254 = vpop.xlane.xlu0 %253
    %v255 = vsel %vm86, %v223, 0.0
    %256 = vadd.xlane.f32.xlu0 %v255
    %v257 = vpop.xlane.xlu0 %256
    %v258 = vsel %vm86, %v224, 0.0
    %259 = vadd.xlane.f32.xlu0 %v258
    %v260 = vpop.xlane.xlu0 %259
    %v261 = vsel %vm86, %v225, 0.0
    %262 = vadd.xlane.f32.xlu0 %v261
    %v263 = vpop.xlane.xlu0 %262
    %v264 = vsel %vm86, %v226, 0.0
    %265 = vadd.xlane.f32.xlu0 %v264
    %v266 = vpop.xlane.xlu0 %265
    %v267 = vsel %vm86, %v227, 0.0
    %268 = vadd.xlane.f32.xlu0 %v267
    %v269 = vpop.xlane.xlu0 %268
    %v270 = vsel %vm86, %v228, 0.0
    %271 = vadd.xlane.f32.xlu0 %v270
    %v272 = vpop.xlane.xlu0 %271
    %v273 = vsel %vm86, %v229, 0.0
    %274 = vadd.xlane.f32.xlu0 %v273
    %v275 = vpop.xlane.xlu0 %274
    %v276 = vsel %vm86, %v230, 0.0
    %277 = vadd.xlane.f32.xlu0 %v276
    %v278 = vpop.xlane.xlu0 %277
    %v279 = vmul.f32 %v54, %v54
    %v280 = vmul.f32 %v56, %v56
    %v281 = vmul.f32 %v58, %v58
    %v282 = vmul.f32 %v60, %v60
    %v283 = vmul.f32 %v62, %v62
    %v284 = vmul.f32 %v64, %v64
    %v285 = vmul.f32 %v66, %v66
    %v286 = vmul.f32 %v68, %v68
    %v287 = vmul.f32 %v70, %v70
    %v288 = vmul.f32 %v72, %v72
    %v289 = vmul.f32 %v74, %v74
    %v290 = vmul.f32 %v76, %v76
    %v291 = vmul.f32 %v78, %v78
    %v292 = vmul.f32 %v80, %v80
    %v293 = vmul.f32 %v82, %v82
    %v294 = vmul.f32 %v84, %v84
    %v295 = vsel %vm86, %v279, 0.0
    %296 = vadd.xlane.f32.xlu0 %v295
    %v297 = vpop.xlane.xlu0 %296
    %v298 = vsel %vm86, %v280, 0.0
    %299 = vadd.xlane.f32.xlu0 %v298
    %v300 = vpop.xlane.xlu0 %299
    %v301 = vsel %vm86, %v281, 0.0
    %302 = vadd.xlane.f32.xlu0 %v301
    %v303 = vpop.xlane.xlu0 %302
    %v304 = vsel %vm86, %v282, 0.0
    %305 = vadd.xlane.f32.xlu0 %v304
    %v306 = vpop.xlane.xlu0 %305
    %v307 = vsel %vm86, %v283, 0.0
    %308 = vadd.xlane.f32.xlu0 %v307
    %v309 = vpop.xlane.xlu0 %308
    %v310 = vsel %vm86, %v284, 0.0
    %311 = vadd.xlane.f32.xlu0 %v310
    %v312 = vpop.xlane.xlu0 %311
    %v313 = vsel %vm86, %v285, 0.0
    %314 = vadd.xlane.f32.xlu0 %v313
    %v315 = vpop.xlane.xlu0 %314
    %v316 = vsel %vm86, %v286, 0.0
    %317 = vadd.xlane.f32.xlu0 %v316
    %v318 = vpop.xlane.xlu0 %317
    %v319 = vsel %vm86, %v287, 0.0
    %320 = vadd.xlane.f32.xlu0 %v319
    %v321 = vpop.xlane.xlu0 %320
    %v322 = vsel %vm86, %v288, 0.0
    %323 = vadd.xlane.f32.xlu0 %v322
    %v324 = vpop.xlane.xlu0 %323
    %v325 = vsel %vm86, %v289, 0.0
    %326 = vadd.xlane.f32.xlu0 %v325
    %v327 = vpop.xlane.xlu0 %326
    %v328 = vsel %vm86, %v290, 0.0
    %329 = vadd.xlane.f32.xlu0 %v328
    %v330 = vpop.xlane.xlu0 %329
    %v331 = vsel %vm86, %v291, 0.0
    %332 = vadd.xlane.f32.xlu0 %v331
    %v333 = vpop.xlane.xlu0 %332
    %v334 = vsel %vm86, %v292, 0.0
    %335 = vadd.xlane.f32.xlu0 %v334
    %v336 = vpop.xlane.xlu0 %335
    %v337 = vsel %vm86, %v293, 0.0
    %338 = vadd.xlane.f32.xlu0 %v337
    %v339 = vpop.xlane.xlu0 %338
    %v340 = vsel %vm86, %v294, 0.0
    %341 = vadd.xlane.f32.xlu0 %v340
    %v342 = vpop.xlane.xlu0 %341
    %v343 = vadd.f32 %v233, %v297
    %v344 = vadd.f32 %v236, %v300
    %v345 = vadd.f32 %v239, %v303
    %v346 = vadd.f32 %v242, %v306
    %v347 = vadd.f32 %v245, %v309
    %v348 = vadd.f32 %v248, %v312
    %v349 = vadd.f32 %v251, %v315
    %v350 = vadd.f32 %v254, %v318
    %v351 = vadd.f32 %v257, %v321
    %v352 = vadd.f32 %v260, %v324
    %v353 = vadd.f32 %v263, %v327
    %v354 = vadd.f32 %v266, %v330
    %v355 = vadd.f32 %v269, %v333
    %v356 = vadd.f32 %v272, %v336
    %v357 = vadd.f32 %v275, %v339
    %v358 = vadd.f32 %v278, %v342
    %v359 = vmul.f32 %v343, 0.0078125
    %v360 = vmul.f32 %v344, 0.0078125
    %v361 = vmul.f32 %v345, 0.0078125
    %v362 = vmul.f32 %v346, 0.0078125
    %v363 = vmul.f32 %v347, 0.0078125
    %v364 = vmul.f32 %v348, 0.0078125
    %v365 = vmul.f32 %v349, 0.0078125
    %v366 = vmul.f32 %v350, 0.0078125
    %v367 = vmul.f32 %v351, 0.0078125
    %v368 = vmul.f32 %v352, 0.0078125
    %v369 = vmul.f32 %v353, 0.0078125
    %v370 = vmul.f32 %v354, 0.0078125
    %v371 = vmul.f32 %v355, 0.0078125
    %v372 = vmul.f32 %v356, 0.0078125
    %v373 = vmul.f32 %v357, 0.0078125
    %v374 = vmul.f32 %v358, 0.0078125
    %v375 = vmul.f32 %v199, %v199
    %v376 = vmul.f32 %v200, %v200
    %v377 = vmul.f32 %v201, %v201
    %v378 = vmul.f32 %v202, %v202
    %v379 = vmul.f32 %v203, %v203
    %v380 = vmul.f32 %v204, %v204
    %v381 = vmul.f32 %v205, %v205
    %v382 = vmul.f32 %v206, %v206
    %v383 = vmul.f32 %v207, %v207
    %v384 = vmul.f32 %v208, %v208
    %v385 = vmul.f32 %v209, %v209
    %v386 = vmul.f32 %v210, %v210
    %v387 = vmul.f32 %v211, %v211
    %v388 = vmul.f32 %v212, %v212
    %v389 = vmul.f32 %v213, %v213
    %v390 = vmul.f32 %v214, %v214
    %v391 = vsub.f32 %v359, %v375
    %v392 = vsub.f32 %v360, %v376
    %v393 = vsub.f32 %v361, %v377
    %v394 = vsub.f32 %v362, %v378
    %v395 = vsub.f32 %v363, %v379
    %v396 = vsub.f32 %v364, %v380
    %v397 = vsub.f32 %v365, %v381
    %v398 = vsub.f32 %v366, %v382
    %v399 = vsub.f32 %v367, %v383
    %v400 = vsub.f32 %v368, %v384
    %v401 = vsub.f32 %v369, %v385
    %v402 = vsub.f32 %v370, %v386
    %v403 = vsub.f32 %v371, %v387
    %v404 = vsub.f32 %v372, %v388
    %v405 = vsub.f32 %v373, %v389
    %v406 = vsub.f32 %v374, %v390
    %v407 = vmax.f32 %v391, 0.0
    %v408 = vmax.f32 %v392, 0.0
    %v409 = vmax.f32 %v393, 0.0
    %v410 = vmax.f32 %v394, 0.0
    %v411 = vmax.f32 %v395, 0.0
    %v412 = vmax.f32 %v396, 0.0
    %v413 = vmax.f32 %v397, 0.0
    %v414 = vmax.f32 %v398, 0.0
    %v415 = vmax.f32 %v399, 0.0
    %v416 = vmax.f32 %v400, 0.0
    %v417 = vmax.f32 %v401, 0.0
    %v418 = vmax.f32 %v402, 0.0
    %v419 = vmax.f32 %v403, 0.0
    %v420 = vmax.f32 %v404, 0.0
    %v421 = vmax.f32 %v405, 0.0
    %v422 = vmax.f32 %v406, 0.0
    %v423 = vadd.f32 %v407, 1e-05
    %v424 = vadd.f32 %v408, 1e-05
    %v425 = vadd.f32 %v409, 1e-05
    %v426 = vadd.f32 %v410, 1e-05
    %v427 = vadd.f32 %v411, 1e-05
    %v428 = vadd.f32 %v412, 1e-05
    %v429 = vadd.f32 %v413, 1e-05
    %v430 = vadd.f32 %v414, 1e-05
    %v431 = vadd.f32 %v415, 1e-05
    %v432 = vadd.f32 %v416, 1e-05
    %v433 = vadd.f32 %v417, 1e-05
    %v434 = vadd.f32 %v418, 1e-05
    %v435 = vadd.f32 %v419, 1e-05
    %v436 = vadd.f32 %v420, 1e-05
    %v437 = vadd.f32 %v421, 1e-05
    %v438 = vadd.f32 %v422, 1e-05
    %v439 = vrsqrt.pop %v423
    %v440 = vrsqrt.pop %v424
    %v441 = vrsqrt.pop %v425
    %v442 = vrsqrt.pop %v426
    %v443 = vrsqrt.pop %v427
    %v444 = vrsqrt.pop %v428
    %v445 = vrsqrt.pop %v429
    %v446 = vrsqrt.pop %v430
    %v447 = vrsqrt.pop %v431
    %v448 = vrsqrt.pop %v432
    %v449 = vrsqrt.pop %v433
    %v450 = vrsqrt.pop %v434
    %v451 = vrsqrt.pop %v435
    %v452 = vrsqrt.pop %v436
    %v453 = vrsqrt.pop %v437
    %v454 = vrsqrt.pop %v438
    %v455 = vsub.f32 %v53, %v199
    %v456 = vsub.f32 %v55, %v200
    %v457 = vsub.f32 %v57, %v201
    %v458 = vsub.f32 %v59, %v202
    %v459 = vsub.f32 %v61, %v203
    %v460 = vsub.f32 %v63, %v204
    %v461 = vsub.f32 %v65, %v205
    %v462 = vsub.f32 %v67, %v206
    %v463 = vsub.f32 %v69, %v207
    %v464 = vsub.f32 %v71, %v208
    %v465 = vsub.f32 %v73, %v209
    %v466 = vsub.f32 %v75, %v210
    %v467 = vsub.f32 %v77, %v211
    %v468 = vsub.f32 %v79, %v212
    %v469 = vsub.f32 %v81, %v213
    %v470 = vsub.f32 %v83, %v214
    %v471 = vmul.f32 %v455, %v439
    %v472 = vmul.f32 %v456, %v440
    %v473 = vmul.f32 %v457, %v441
    %v474 = vmul.f32 %v458, %v442
    %v475 = vmul.f32 %v459, %v443
    %v476 = vmul.f32 %v460, %v444
    %v477 = vmul.f32 %v461, %v445
    %v478 = vmul.f32 %v462, %v446
    %v479 = vmul.f32 %v463, %v447
    %v480 = vmul.f32 %v464, %v448
    %v481 = vmul.f32 %v465, %v449
    %v482 = vmul.f32 %v466, %v450
    %v483 = vmul.f32 %v467, %v451
    %v484 = vmul.f32 %v468, %v452
    %v485 = vmul.f32 %v469, %v453
    %v486 = vmul.f32 %v470, %v454
    %v487 = vlaneseq
    %v488 = vshrl.u32 %v487, 7
    %v489 = vsub.s32 0, %v488
    %v490 = vrot.slane %v85, %v489
    %v491 = vmul.f32 %v471, %v490
    %v492 = vmul.f32 %v472, %v490
    %v493 = vmul.f32 %v473, %v490
    %v494 = vmul.f32 %v474, %v490
    %v495 = vmul.f32 %v475, %v490
    %v496 = vmul.f32 %v476, %v490
    %v497 = vmul.f32 %v477, %v490
    %v498 = vmul.f32 %v478, %v490
    %v499 = vmul.f32 %v479, %v490
    %v500 = vmul.f32 %v480, %v490
    %v501 = vmul.f32 %v481, %v490
    %v502 = vmul.f32 %v482, %v490
    %v503 = vmul.f32 %v483, %v490
    %v504 = vmul.f32 %v484, %v490
    %v505 = vmul.f32 %v485, %v490
    %v506 = vmul.f32 %v486, %v490
    %v507 = vlaneseq
    %v508 = vshrl.u32 %v507, 7
    %v509 = vsub.s32 2, %v508
    %v510 = vrot.slane %v85, %v509
    %v511 = vadd.f32 %v491, %v510
    %v512 = vadd.f32 %v492, %v510
    %v513 = vadd.f32 %v493, %v510
    %v514 = vadd.f32 %v494, %v510
    %v515 = vadd.f32 %v495, %v510
    %v516 = vadd.f32 %v496, %v510
    %v517 = vadd.f32 %v497, %v510
    %v518 = vadd.f32 %v498, %v510
    %v519 = vadd.f32 %v499, %v510
    %v520 = vadd.f32 %v500, %v510
    %v521 = vadd.f32 %v501, %v510
    %v522 = vadd.f32 %v502, %v510
    %v523 = vadd.f32 %v503, %v510
    %v524 = vadd.f32 %v504, %v510
    %v525 = vadd.f32 %v505, %v510
    %v526 = vadd.f32 %v506, %v510
    %v527 = vsub.f32 %v54, %v199
    %v528 = vsub.f32 %v56, %v200
    %v529 = vsub.f32 %v58, %v201
    %v530 = vsub.f32 %v60, %v202
    %v531 = vsub.f32 %v62, %v203
    %v532 = vsub.f32 %v64, %v204
    %v533 = vsub.f32 %v66, %v205
    %v534 = vsub.f32 %v68, %v206
    %v535 = vsub.f32 %v70, %v207
    %v536 = vsub.f32 %v72, %v208
    %v537 = vsub.f32 %v74, %v209
    %v538 = vsub.f32 %v76, %v210
    %v539 = vsub.f32 %v78, %v211
    %v540 = vsub.f32 %v80, %v212
    %v541 = vsub.f32 %v82, %v213
    %v542 = vsub.f32 %v84, %v214
    %v543 = vmul.f32 %v527, %v439
    %v544 = vmul.f32 %v528, %v440
    %v545 = vmul.f32 %v529, %v441
    %v546 = vmul.f32 %v530, %v442
    %v547 = vmul.f32 %v531, %v443
    %v548 = vmul.f32 %v532, %v444
    %v549 = vmul.f32 %v533, %v445
    %v550 = vmul.f32 %v534, %v446
    %v551 = vmul.f32 %v535, %v447
    %v552 = vmul.f32 %v536, %v448
    %v553 = vmul.f32 %v537, %v449
    %v554 = vmul.f32 %v538, %v450
    %v555 = vmul.f32 %v539, %v451
    %v556 = vmul.f32 %v540, %v452
    %v557 = vmul.f32 %v541, %v453
    %v558 = vmul.f32 %v542, %v454
    %v559 = vlaneseq
    %v560 = vshrl.u32 %v559, 7
    %v561 = vsub.s32 1, %v560
    %v562 = vrot.slane %v85, %v561
    %v563 = vmul.f32 %v543, %v562
    %v564 = vmul.f32 %v544, %v562
    %v565 = vmul.f32 %v545, %v562
    %v566 = vmul.f32 %v546, %v562
    %v567 = vmul.f32 %v547, %v562
    %v568 = vmul.f32 %v548, %v562
    %v569 = vmul.f32 %v549, %v562
    %v570 = vmul.f32 %v550, %v562
    %v571 = vmul.f32 %v551, %v562
    %v572 = vmul.f32 %v552, %v562
    %v573 = vmul.f32 %v553, %v562
    %v574 = vmul.f32 %v554, %v562
    %v575 = vmul.f32 %v555, %v562
    %v576 = vmul.f32 %v556, %v562
    %v577 = vmul.f32 %v557, %v562
    %v578 = vmul.f32 %v558, %v562
    %v579 = vlaneseq
    %v580 = vshrl.u32 %v579, 7
    %v581 = vsub.s32 3, %v580
    %v582 = vrot.slane %v85, %v581
    %v583 = vadd.f32 %v563, %v582
    %v584 = vadd.f32 %v564, %v582
    %v585 = vadd.f32 %v565, %v582
    %v586 = vadd.f32 %v566, %v582
    %v587 = vadd.f32 %v567, %v582
    %v588 = vadd.f32 %v568, %v582
    %v589 = vadd.f32 %v569, %v582
    %v590 = vadd.f32 %v570, %v582
    %v591 = vadd.f32 %v571, %v582
    %v592 = vadd.f32 %v572, %v582
    %v593 = vadd.f32 %v573, %v582
    %v594 = vadd.f32 %v574, %v582
    %v595 = vadd.f32 %v575, %v582
    %v596 = vadd.f32 %v576, %v582
    %v597 = vadd.f32 %v577, %v582
    %v598 = vadd.f32 %v578, %v582
    %v599 = vld [vmem:[#allocation6] sm:$0xff]
    %v600 = vld [vmem:[#allocation6 + $0x8] sm:$0xff]
    %v601 = vld [vmem:[#allocation6 + $0x10] sm:$0xff]
    %v602 = vld [vmem:[#allocation6 + $0x18] sm:$0xff]
    %v603 = vld [vmem:[#allocation6 + $0x20] sm:$0xff]
    %v604 = vld [vmem:[#allocation6 + $0x28] sm:$0xff]
    %v605 = vld [vmem:[#allocation6 + $0x30] sm:$0xff]
    %v606 = vld [vmem:[#allocation6 + $0x38] sm:$0xff]
    %s607 = scalar_lea.vmem [#allocation6], 64
    %v608 = vld [vmem:[%s607] sm:$0xff]
    %v609 = vld [vmem:[%s607 + $0x8] sm:$0xff]
    %v610 = vld [vmem:[%s607 + $0x10] sm:$0xff]
    %v611 = vld [vmem:[%s607 + $0x18] sm:$0xff]
    %v612 = vld [vmem:[%s607 + $0x20] sm:$0xff]
    %v613 = vld [vmem:[%s607 + $0x28] sm:$0xff]
    %v614 = vld [vmem:[%s607 + $0x30] sm:$0xff]
    %v615 = vld [vmem:[%s607 + $0x38] sm:$0xff]
    %v617 = vsel %vm86, %v583, 0
    %v620 = vsel %vm86, %v584, 0
    %v623 = vsel %vm86, %v585, 0
    %v626 = vsel %vm86, %v586, 0
    %v629 = vsel %vm86, %v587, 0
    %v632 = vsel %vm86, %v588, 0
    %v635 = vsel %vm86, %v589, 0
    %v638 = vsel %vm86, %v590, 0
    %v641 = vsel %vm86, %v591, 0
    %v644 = vsel %vm86, %v592, 0
    %v647 = vsel %vm86, %v593, 0
    %v650 = vsel %vm86, %v594, 0
    %v653 = vsel %vm86, %v595, 0
    %v656 = vsel %vm86, %v596, 0
    %v659 = vsel %vm86, %v597, 0
    %v662 = vsel %vm86, %v598, 0
    %664 = vmatprep.subr.mxu0 0.0
    %665 = vmatpush1.msra.mxu0 %v608
    %666 = vmatprep.subr.mxu0 0.0
    %667 = vmatpush1.msra.mxu0 %v609
    %668 = vmatprep.subr.mxu0 0.0
    %669 = vmatpush1.msra.mxu0 %v610
    %670 = vmatprep.subr.mxu0 0.0
    %671 = vmatpush1.msra.mxu0 %v611
    %672 = vmatprep.subr.mxu0 0.0
    %673 = vmatpush1.msra.mxu0 %v612
    %674 = vmatprep.subr.mxu0 0.0
    %675 = vmatpush1.msra.mxu0 %v613
    %676 = vmatprep.subr.mxu0 0.0
    %677 = vmatpush1.msra.mxu0 %v614
    %678 = vmatprep.subr.mxu0 0.0
    %679 = vmatpush1.msra.mxu0 %v615
    %680 = vmatprep.subr.mxu0 0.0
    %681 = vmatpush1.msra.mxu0 0.0
    %682 = vmatprep.subr.mxu0 0.0
    %683 = vmatpush1.msra.mxu0 0.0
    %684 = vmatprep.subr.mxu0 0.0
    %685 = vmatpush1.msra.mxu0 0.0
    %686 = vmatprep.subr.mxu0 0.0
    %687 = vmatpush1.msra.mxu0 0.0
    %688 = vmatprep.subr.mxu0 0.0
    %689 = vmatpush1.msra.mxu0 0.0
    %690 = vmatprep.subr.mxu0 0.0
    %691 = vmatpush1.msra.mxu0 0.0
    %692 = vmatprep.subr.mxu0 0.0
    %693 = vmatpush1.msra.mxu0 0.0
    %694 = vmatprep.subr.mxu0 0.0
    %695 = vmatpush1.msra.mxu0 0.0
    %696 = vmatprep.subr.mxu0 0.0
    %697 = vmatpush1.msra.mxu0 0.0
    %698 = vmatprep.subr.mxu0 0.0
    %699 = vmatpush1.msra.mxu0 0.0
    %700 = vmatprep.subr.mxu0 0.0
    %701 = vmatpush1.msra.mxu0 0.0
    %702 = vmatprep.subr.mxu0 0.0
    %703 = vmatpush1.msra.mxu0 0.0
    %704 = vmatprep.subr.mxu0 0.0
    %705 = vmatpush1.msra.mxu0 0.0
    %706 = vmatprep.subr.mxu0 0.0
    %707 = vmatpush1.msra.mxu0 0.0
    %708 = vmatprep.subr.mxu0 0.0
    %709 = vmatpush1.msra.mxu0 0.0
    %710 = vmatprep.subr.mxu0 0.0
    %711 = vmatpush1.msra.mxu0 0.0
    %712 = vmatprep.subr.mxu0 0.0
    %713 = vmatpush1.msra.mxu0 0.0
    %714 = vmatprep.subr.mxu0 0.0
    %715 = vmatpush1.msra.mxu0 0.0
    %716 = vmatprep.subr.mxu0 0.0
    %717 = vmatpush1.msra.mxu0 0.0
    %718 = vmatprep.subr.mxu0 0.0
    %719 = vmatpush1.msra.mxu0 0.0
    %720 = vmatprep.subr.mxu0 0.0
    %721 = vmatpush1.msra.mxu0 0.0
    %722 = vmatprep.subr.mxu0 0.0
    %723 = vmatpush1.msra.mxu0 0.0
    %724 = vmatprep.subr.mxu0 0.0
    %725 = vmatpush1.msra.mxu0 0.0
    %726 = vmatprep.subr.mxu0 0.0
    %727 = vmatpush1.msra.mxu0 0.0
    %728 = vmatprep.mubr.f32.mxu0 0.0
    %729 = vmatmul.mubr.f32.gmra.mrb[0].mxu0 %v617
    %v730 = vpop.f32.mrb[0].mxu0
    %v731 = vadd.f32 0.0, %v730
    %v732 = vpop.f32.mrb[0].mxu0
    %733 = vmatprep.mubr.f32.mxu0 0.0
    %734 = vmatmul.mubr.f32.gmra.mrb[0].mxu0 %v620
    %v735 = vpop.f32.mrb[0].mxu0
    %v736 = vadd.f32 0.0, %v735
    %v737 = vpop.f32.mrb[0].mxu0
    %738 = vmatprep.mubr.f32.mxu0 0.0
    %739 = vmatmul.mubr.f32.gmra.mrb[0].mxu0 %v623
    %v740 = vpop.f32.mrb[0].mxu0
    %v741 = vadd.f32 0.0, %v740
    %v742 = vpop.f32.mrb[0].mxu0
    %743 = vmatprep.mubr.f32.mxu0 0.0
    %744 = vmatmul.mubr.f32.gmra.mrb[0].mxu0 %v626
    %v745 = vpop.f32.mrb[0].mxu0
    %v746 = vadd.f32 0.0, %v745
    %v747 = vpop.f32.mrb[0].mxu0
    %748 = vmatprep.mubr.f32.mxu0 0.0
    %749 = vmatmul.mubr.f32.gmra.mrb[0].mxu0 %v629
    %v750 = vpop.f32.mrb[0].mxu0
    %v751 = vadd.f32 0.0, %v750
    %v752 = vpop.f32.mrb[0].mxu0
    %753 = vmatprep.mubr.f32.mxu0 0.0
    %754 = vmatmul.mubr.f32.gmra.mrb[0].mxu0 %v632
    %v755 = vpop.f32.mrb[0].mxu0
    %v756 = vadd.f32 0.0, %v755
    %v757 = vpop.f32.mrb[0].mxu0
    %758 = vmatprep.mubr.f32.mxu0 0.0
    %759 = vmatmul.mubr.f32.gmra.mrb[0].mxu0 %v635
    %v760 = vpop.f32.mrb[0].mxu0
    %v761 = vadd.f32 0.0, %v760
    %v762 = vpop.f32.mrb[0].mxu0
    %763 = vmatprep.mubr.f32.mxu0 0.0
    %764 = vmatmul.mubr.f32.gmra.mrb[0].mxu0 %v638
    %v765 = vpop.f32.mrb[0].mxu0
    %v766 = vadd.f32 0.0, %v765
    %v767 = vpop.f32.mrb[0].mxu0
    %768 = vmatprep.mubr.f32.mxu0 0.0
    %769 = vmatmul.mubr.f32.gmra.mrb[0].mxu0 %v641
    %v770 = vpop.f32.mrb[0].mxu0
    %v771 = vadd.f32 0.0, %v770
    %v772 = vpop.f32.mrb[0].mxu0
    %773 = vmatprep.mubr.f32.mxu0 0.0
    %774 = vmatmul.mubr.f32.gmra.mrb[0].mxu0 %v644
    %v775 = vpop.f32.mrb[0].mxu0
    %v776 = vadd.f32 0.0, %v775
    %v777 = vpop.f32.mrb[0].mxu0
    %778 = vmatprep.mubr.f32.mxu0 0.0
    %779 = vmatmul.mubr.f32.gmra.mrb[0].mxu0 %v647
    %v780 = vpop.f32.mrb[0].mxu0
    %v781 = vadd.f32 0.0, %v780
    %v782 = vpop.f32.mrb[0].mxu0
    %783 = vmatprep.mubr.f32.mxu0 0.0
    %784 = vmatmul.mubr.f32.gmra.mrb[0].mxu0 %v650
    %v785 = vpop.f32.mrb[0].mxu0
    %v786 = vadd.f32 0.0, %v785
    %v787 = vpop.f32.mrb[0].mxu0
    %788 = vmatprep.mubr.f32.mxu0 0.0
    %789 = vmatmul.mubr.f32.gmra.mrb[0].mxu0 %v653
    %v790 = vpop.f32.mrb[0].mxu0
    %v791 = vadd.f32 0.0, %v790
    %v792 = vpop.f32.mrb[0].mxu0
    %793 = vmatprep.mubr.f32.mxu0 0.0
    %794 = vmatmul.mubr.f32.gmra.mrb[0].mxu0 %v656
    %v795 = vpop.f32.mrb[0].mxu0
    %v796 = vadd.f32 0.0, %v795
    %v797 = vpop.f32.mrb[0].mxu0
    %798 = vmatprep.mubr.f32.mxu0 0.0
    %799 = vmatmul.mubr.f32.gmra.mrb[0].mxu0 %v659
    %v800 = vpop.f32.mrb[0].mxu0
    %v801 = vadd.f32 0.0, %v800
    %v802 = vpop.f32.mrb[0].mxu0
    %803 = vmatprep.mubr.f32.mxu0 0.0
    %804 = vmatmul.mubr.f32.gmra.mrb[0].mxu0 %v662
    %v805 = vpop.f32.mrb[0].mxu0
    %v806 = vadd.f32 0.0, %v805
    %v807 = vpop.f32.mrb[0].mxu0
    %808 = vdwg.mxu0
    %v810 = vsel %vm86, %v511, 0
    %v813 = vsel %vm86, %v512, 0
    %v816 = vsel %vm86, %v513, 0
    %v819 = vsel %vm86, %v514, 0
    %v822 = vsel %vm86, %v515, 0
    %v825 = vsel %vm86, %v516, 0
    %v828 = vsel %vm86, %v517, 0
    %v831 = vsel %vm86, %v518, 0
    %v834 = vsel %vm86, %v519, 0
    %v837 = vsel %vm86, %v520, 0
    %v840 = vsel %vm86, %v521, 0
    %v843 = vsel %vm86, %v522, 0
    %v846 = vsel %vm86, %v523, 0
    %v849 = vsel %vm86, %v524, 0
    %v852 = vsel %vm86, %v525, 0
    %v855 = vsel %vm86, %v526, 0
    %857 = vmatprep.subr.mxu0 0.0
    %858 = vmatpush1.msra.mxu0 %v599
    %859 = vmatprep.subr.mxu0 0.0
    %860 = vmatpush1.msra.mxu0 %v600
    %861 = vmatprep.subr.mxu0 0.0
    %862 = vmatpush1.msra.mxu0 %v601
    %863 = vmatprep.subr.mxu0 0.0
    %864 = vmatpush1.msra.mxu0 %v602
    %865 = vmatprep.subr.mxu0 0.0
    %866 = vmatpush1.msra.mxu0 %v603
    %867 = vmatprep.subr.mxu0 0.0
    %868 = vmatpush1.msra.mxu0 %v604
    %869 = vmatprep.subr.mxu0 0.0
    %870 = vmatpush1.msra.mxu0 %v605
    %871 = vmatprep.subr.mxu0 0.0
    %872 = vmatpush1.msra.mxu0 %v606
    %873 = vmatprep.subr.mxu0 0.0
    %874 = vmatpush1.msra.mxu0 0.0
    %875 = vmatprep.subr.mxu0 0.0
    %876 = vmatpush1.msra.mxu0 0.0
    %877 = vmatprep.subr.mxu0 0.0
    %878 = vmatpush1.msra.mxu0 0.0
    %879 = vmatprep.subr.mxu0 0.0
    %880 = vmatpush1.msra.mxu0 0.0
    %881 = vmatprep.subr.mxu0 0.0
    %882 = vmatpush1.msra.mxu0 0.0
    %883 = vmatprep.subr.mxu0 0.0
    %884 = vmatpush1.msra.mxu0 0.0
    %885 = vmatprep.subr.mxu0 0.0
    %886 = vmatpush1.msra.mxu0 0.0
    %887 = vmatprep.subr.mxu0 0.0
    %888 = vmatpush1.msra.mxu0 0.0
    %889 = vmatprep.subr.mxu0 0.0
    %890 = vmatpush1.msra.mxu0 0.0
    %891 = vmatprep.subr.mxu0 0.0
    %892 = vmatpush1.msra.mxu0 0.0
    %893 = vmatprep.subr.mxu0 0.0
    %894 = vmatpush1.msra.mxu0 0.0
    %895 = vmatprep.subr.mxu0 0.0
    %896 = vmatpush1.msra.mxu0 0.0
    %897 = vmatprep.subr.mxu0 0.0
    %898 = vmatpush1.msra.mxu0 0.0
    %899 = vmatprep.subr.mxu0 0.0
    %900 = vmatpush1.msra.mxu0 0.0
    %901 = vmatprep.subr.mxu0 0.0
    %902 = vmatpush1.msra.mxu0 0.0
    %903 = vmatprep.subr.mxu0 0.0
    %904 = vmatpush1.msra.mxu0 0.0
    %905 = vmatprep.subr.mxu0 0.0
    %906 = vmatpush1.msra.mxu0 0.0
    %907 = vmatprep.subr.mxu0 0.0
    %908 = vmatpush1.msra.mxu0 0.0
    %909 = vmatprep.subr.mxu0 0.0
    %910 = vmatpush1.msra.mxu0 0.0
    %911 = vmatprep.subr.mxu0 0.0
    %912 = vmatpush1.msra.mxu0 0.0
    %913 = vmatprep.subr.mxu0 0.0
    %914 = vmatpush1.msra.mxu0 0.0
    %915 = vmatprep.subr.mxu0 0.0
    %916 = vmatpush1.msra.mxu0 0.0
    %917 = vmatprep.subr.mxu0 0.0
    %918 = vmatpush1.msra.mxu0 0.0
    %919 = vmatprep.subr.mxu0 0.0
    %920 = vmatpush1.msra.mxu0 0.0
    %921 = vmatprep.mubr.f32.mxu0 0.0
    %922 = vmatmul.mubr.f32.gmra.mrb[0].mxu0 %v810
    %v923 = vpop.f32.mrb[0].mxu0
    %v924 = vadd.f32 %v731, %v923
    %v925 = vpop.f32.mrb[0].mxu0
    %926 = vmatprep.mubr.f32.mxu0 0.0
    %927 = vmatmul.mubr.f32.gmra.mrb[0].mxu0 %v813
    %v928 = vpop.f32.mrb[0].mxu0
    %v929 = vadd.f32 %v736, %v928
    %v930 = vpop.f32.mrb[0].mxu0
    %931 = vmatprep.mubr.f32.mxu0 0.0
    %932 = vmatmul.mubr.f32.gmra.mrb[0].mxu0 %v816
    %v933 = vpop.f32.mrb[0].mxu0
    %v934 = vadd.f32 %v741, %v933
    %v935 = vpop.f32.mrb[0].mxu0
    %936 = vmatprep.mubr.f32.mxu0 0.0
    %937 = vmatmul.mubr.f32.gmra.mrb[0].mxu0 %v819
    %v938 = vpop.f32.mrb[0].mxu0
    %v939 = vadd.f32 %v746, %v938
    %v940 = vpop.f32.mrb[0].mxu0
    %941 = vmatprep.mubr.f32.mxu0 0.0
    %942 = vmatmul.mubr.f32.gmra.mrb[0].mxu0 %v822
    %v943 = vpop.f32.mrb[0].mxu0
    %v944 = vadd.f32 %v751, %v943
    %v945 = vpop.f32.mrb[0].mxu0
    %946 = vmatprep.mubr.f32.mxu0 0.0
    %947 = vmatmul.mubr.f32.gmra.mrb[0].mxu0 %v825
    %v948 = vpop.f32.mrb[0].mxu0
    %v949 = vadd.f32 %v756, %v948
    %v950 = vpop.f32.mrb[0].mxu0
    %951 = vmatprep.mubr.f32.mxu0 0.0
    %952 = vmatmul.mubr.f32.gmra.mrb[0].mxu0 %v828
    %v953 = vpop.f32.mrb[0].mxu0
    %v954 = vadd.f32 %v761, %v953
    %v955 = vpop.f32.mrb[0].mxu0
    %956 = vmatprep.mubr.f32.mxu0 0.0
    %957 = vmatmul.mubr.f32.gmra.mrb[0].mxu0 %v831
    %v958 = vpop.f32.mrb[0].mxu0
    %v959 = vadd.f32 %v766, %v958
    %v960 = vpop.f32.mrb[0].mxu0
    %961 = vmatprep.mubr.f32.mxu0 0.0
    %962 = vmatmul.mubr.f32.gmra.mrb[0].mxu0 %v834
    %v963 = vpop.f32.mrb[0].mxu0
    %v964 = vadd.f32 %v771, %v963
    %v965 = vpop.f32.mrb[0].mxu0
    %966 = vmatprep.mubr.f32.mxu0 0.0
    %967 = vmatmul.mubr.f32.gmra.mrb[0].mxu0 %v837
    %v968 = vpop.f32.mrb[0].mxu0
    %v969 = vadd.f32 %v776, %v968
    %v970 = vpop.f32.mrb[0].mxu0
    %971 = vmatprep.mubr.f32.mxu0 0.0
    %972 = vmatmul.mubr.f32.gmra.mrb[0].mxu0 %v840
    %v973 = vpop.f32.mrb[0].mxu0
    %v974 = vadd.f32 %v781, %v973
    %v975 = vpop.f32.mrb[0].mxu0
    %976 = vmatprep.mubr.f32.mxu0 0.0
    %977 = vmatmul.mubr.f32.gmra.mrb[0].mxu0 %v843
    %v978 = vpop.f32.mrb[0].mxu0
    %v979 = vadd.f32 %v786, %v978
    %v980 = vpop.f32.mrb[0].mxu0
    %981 = vmatprep.mubr.f32.mxu0 0.0
    %982 = vmatmul.mubr.f32.gmra.mrb[0].mxu0 %v846
    %v983 = vpop.f32.mrb[0].mxu0
    %v984 = vadd.f32 %v791, %v983
    %v985 = vpop.f32.mrb[0].mxu0
    %986 = vmatprep.mubr.f32.mxu0 0.0
    %987 = vmatmul.mubr.f32.gmra.mrb[0].mxu0 %v849
    %v988 = vpop.f32.mrb[0].mxu0
    %v989 = vadd.f32 %v796, %v988
    %v990 = vpop.f32.mrb[0].mxu0
    %991 = vmatprep.mubr.f32.mxu0 0.0
    %992 = vmatmul.mubr.f32.gmra.mrb[0].mxu0 %v852
    %v993 = vpop.f32.mrb[0].mxu0
    %v994 = vadd.f32 %v801, %v993
    %v995 = vpop.f32.mrb[0].mxu0
    %996 = vmatprep.mubr.f32.mxu0 0.0
    %997 = vmatmul.mubr.f32.gmra.mrb[0].mxu0 %v855
    %v998 = vpop.f32.mrb[0].mxu0
    %v999 = vadd.f32 %v806, %v998
    %v1000 = vpop.f32.mrb[0].mxu0
    %1001 = vdwg.mxu0
    %1002 = vst.msk [vmem:[%s3] sm:$0xff] %vm86, %v924
    %1003 = vst.msk [vmem:[%s3 + $0x8] sm:$0xff] %vm86, %v929
    %1004 = vst.msk [vmem:[%s3 + $0x10] sm:$0xff] %vm86, %v934
    %1005 = vst.msk [vmem:[%s3 + $0x18] sm:$0xff] %vm86, %v939
    %1006 = vst.msk [vmem:[%s3 + $0x20] sm:$0xff] %vm86, %v944
    %1007 = vst.msk [vmem:[%s3 + $0x28] sm:$0xff] %vm86, %v949
    %1008 = vst.msk [vmem:[%s3 + $0x30] sm:$0xff] %vm86, %v954
    %1009 = vst.msk [vmem:[%s3 + $0x38] sm:$0xff] %vm86, %v959
    %1010 = vst.msk [vmem:[%s3 + $0x40] sm:$0xff] %vm86, %v964
    %1011 = vst.msk [vmem:[%s3 + $0x48] sm:$0xff] %vm86, %v969
    %1012 = vst.msk [vmem:[%s3 + $0x50] sm:$0xff] %vm86, %v974
    %1013 = vst.msk [vmem:[%s3 + $0x58] sm:$0xff] %vm86, %v979
    %1014 = vst.msk [vmem:[%s3 + $0x60] sm:$0xff] %vm86, %v984
    %1015 = vst.msk [vmem:[%s3 + $0x68] sm:$0xff] %vm86, %v989
    %1016 = vst.msk [vmem:[%s3 + $0x70] sm:$0xff] %vm86, %v994
    %1017 = vst.msk [vmem:[%s3 + $0x78] sm:$0xff] %vm86, %v999
    // Predicated region
    $region26: #{tpu_custom_call.1} parent=1 // pred_check
      _
    $region27: #{tpu_custom_call.1} parent=1 // pred_check_branch
      %1019 = sbr.rel (0) target = $region29
    $region28: #{tpu_custom_call.1} parent=1 // pred_region
      _
    $region29: #{tpu_custom_call.1} parent=1 // pred_fallthru
      _
    // Predicated region
    $region30: #{tpu_custom_call.1} parent=1 // pred_check
      _
    $region31: #{tpu_custom_call.1} parent=1 // pred_check_branch
      %1021 = sbr.rel (0) target = $region33
    $region32: #{tpu_custom_call.1} parent=1 // pred_region
      _
    $region33: #{tpu_custom_call.1} parent=1 // pred_fallthru
      _
    %1022 = vsyncpa [#allocation3], 1
    %1023 = vsyncpa [#allocation5], 1

</llo_original>
